<compile_context>
chip_gen: v5e
topology: v5e:2x2
jax: 0.10.0
libtpu: 0.0.40
codegen_flags: <defaults>
</compile_context>

<pallas_src>
import jax
import jax.numpy as jnp
from jax.experimental import pallas as pl
from jax.experimental.pallas import tpu as pltpu

_LANE_WIDTH = 512       # last-dim lane width (multiple of 128 -> unmasked stores)
_MAX_ROW_BLOCK = 1024   # rows per grid step: 1024*512*4 B = 2 MiB int32 tile


def _add_kernel(idx_ref, add_ref, out_ref):
    # SMEM scalar read + whole-tile elementwise add on the VPU.
    out_ref[...] = idx_ref[...] + add_ref[0]


def _pallas_add(idx2d, add_arr, row_block):
    rows, width = idx2d.shape
    grid = (rows // row_block,)
    return pl.pallas_call(
        _add_kernel,
        out_shape=jax.ShapeDtypeStruct((rows, width), idx2d.dtype),
        grid=grid,
        in_specs=[
            pl.BlockSpec((row_block, width), lambda i: (i, 0)),
            pl.BlockSpec(memory_space=pltpu.MemorySpace.SMEM),  # add_value scalar
        ],
        out_specs=pl.BlockSpec((row_block, width), lambda i: (i, 0)),
        input_output_aliases={0: 0},  # in-place elementwise add
        compiler_params=pltpu.CompilerParams(
            dimension_semantics=("parallel",),  # independent tiles; shards on v7x's 2 TCs
        ),
    )(idx2d, add_arr)


def dummy_gpt_forward(idx, add_value=1):
    """Pallas implementation of DummyGPT.forward: returns (idx + add_value, None)."""
    orig_shape = idx.shape
    orig_dtype = idx.dtype
    n = int(idx.size)

    # add_value as a runtime SMEM scalar -> distinct values do NOT retrace/recompile.
    add_arr = jnp.asarray(add_value, dtype=orig_dtype).reshape((1,))

    # Lane-dense layout: flatten, pad to a multiple of the 512-wide lane slab.
    flat = idx.reshape((-1,))
    rows = pl.cdiv(n, _LANE_WIDTH)
    if rows <= _MAX_ROW_BLOCK:
        # Single grid step; block == full array (exempt from (8,128) divisibility).
        rows_padded = rows
        row_block = rows
    else:
        rows_padded = pl.cdiv(rows, _MAX_ROW_BLOCK) * _MAX_ROW_BLOCK
        row_block = _MAX_ROW_BLOCK  # multiple of 8; width 512 is a multiple of 128

    n_padded = rows_padded * _LANE_WIDTH
    if n_padded != n:
        flat = jnp.pad(flat, (0, n_padded - n))
    idx2d = flat.reshape((rows_padded, _LANE_WIDTH))

    out2d = _pallas_add(idx2d, add_arr, row_block)
    out = out2d.reshape((-1,))[:n].reshape(orig_shape)
    # The module's second return value is the Python literal None (not a tensor).
    return out, None


if __name__ == "__main__":
    # DummyGPT has no learnable parameters (only the python scalar add_value=1).
    key = jax.random.PRNGKey(0)
    B, T = 2, 8
    idx = jax.random.randint(key, (B, T), minval=0, maxval=100, dtype=jnp.int32)
    expected = idx + 1  # reference computed before the kernel call

    out, none_val = dummy_gpt_forward(idx, add_value=1)
    out = jax.block_until_ready(out)

    assert none_val is None
    assert out.dtype == idx.dtype
    assert out.shape == idx.shape
    assert bool(jnp.all(out == expected))

    # Second call with a different add_value: exercises the SMEM scalar path
    # (same compiled kernel, no retrace for the new value).
    out5, _ = dummy_gpt_forward(idx, add_value=5)
    out5 = jax.block_until_ready(out5)
    assert bool(jnp.all(out5 == idx + 5))

    print("KERNEL_OK")
</pallas_src>

<mosaic_0001>
module attributes {stable_mosaic.version = 11 : i64} {
  func.func @_add_kernel(%arg0: i32, %arg1: memref<1x512xi32, #tpu.memory_space<vmem>>, %arg2: memref<1xi32, #tpu.memory_space<smem>>, %arg3: memref<1x512xi32, #tpu.memory_space<vmem>>) attributes {dimension_semantics = [#tpu.dimension_semantics<parallel>], iteration_bounds = array<i64: 1>, scalar_prefetch = 0 : i64, scratch_operands = 0 : i64, tpu.core_type = #tpu.core_type<tc>, window_params = [{transform_indices = @transform_0, window_bounds = array<i64: 1, 512>}, {transform_indices = @transform_1, window_bounds = array<i64: 1>}, {transform_indices = @transform_2, window_bounds = array<i64: 1, 512>}]} {
    %c0 = arith.constant 0 : index
    %c0_0 = arith.constant 0 : index
    %0 = vector.load %arg1[%c0, %c0_0] : memref<1x512xi32, #tpu.memory_space<vmem>>, vector<1x512xi32>
    %c0_1 = arith.constant 0 : index
    %1 = memref.load %arg2[%c0_1] : memref<1xi32, #tpu.memory_space<smem>>
    %2 = vector.broadcast %1 : i32 to vector<1x512xi32>
    %3 = arith.addi %0, %2 : vector<1x512xi32>
    %c0_2 = arith.constant 0 : index
    %c0_3 = arith.constant 0 : index
    %4 = vector.load %arg3[%c0_2, %c0_3] : memref<1x512xi32, #tpu.memory_space<vmem>>, vector<1x512xi32>
    tpu.vector_store %arg3[%c0_2, %c0_3], %3 {strides = array<i32>} : memref<1x512xi32, #tpu.memory_space<vmem>>, vector<1x512xi32>,
    return
  }
  func.func @transform_0(%arg0: i32) -> (i32, i32) {
    %c0_i32 = arith.constant 0 : i32
    %c0_i32_0 = arith.constant 0 : i32
    return %arg0, %c0_i32 : i32, i32
  }
  func.func @transform_1(%arg0: i32) -> i32 {
    %c0_i32 = arith.constant 0 : i32
    %c0_i32_0 = arith.constant 0 : i32
    return %c0_i32 : i32
  }
  func.func @transform_2(%arg0: i32) -> (i32, i32) {
    %c0_i32 = arith.constant 0 : i32
    %c0_i32_0 = arith.constant 0 : i32
    return %arg0, %c0_i32 : i32, i32
  }
}

</mosaic_0001>

<llo_original>
// kernel: tpu_custom_call.1
$region0: #{tpu_custom_call.1}
  #allocation0 [shape = 'u32[]', space=smem, size = 0x4, offset = 0x4, fixed_abs, tag = 'smem constant byte address 0x4 - core index']
  #allocation1 [shape = 'u32[72,128]{1,0:T(1,128)}', space=vmem, size = 0x9000, scoped, tag = 'internal scratch']
  #allocation2 [shape = 's32[1]{0:T(128)S(6)}', space=smem, size = 0x200, scoped, tag = 'scoped memory for tpu_custom_call.1']
  %s0 = inlined_call_operand.hbm [shape: s32[1,512], index: 0, kind: input, shape index: {}, may-alias: {0,2}]
  %s1 = inlined_call_operand.<no memory space> [shape: s32[1], index: 1, kind: input, shape index: {}]
  %s2 = inlined_call_operand.hbm [shape: s32[1,512], index: 2, kind: output, shape index: {}, may-alias: {0,2}]
  %s3 = sld [smem:[#allocation0]]
  $region22: #{tpu_custom_call.1} parent=0
    _
  %s5 = ssub.s32 1, %s3
  %s6 = scalar_select 0, %s5, %s3
  %7 = sst [smem:[#allocation2]] %s1
  $region1: #{tpu_custom_call.1} parent=0
    #allocation3 [shape = 'u8[2048]{0}', space=vmem, size = 0x800, scoped, tag = 'input window, operand 0, single buffered']
    #allocation4 [shape = 's32[1]{0}', space=sflag, size = 0x4, scoped, tag = 'scoped memory for tpu_custom_call.1']
    #allocation5 [shape = 's32[1]{0}', space=sflag, size = 0x4, scoped, tag = 'scoped memory for tpu_custom_call.1']
    #allocation6 [shape = 'u8[2048]{0}', space=vmem, size = 0x800, scoped, tag = 'output window, operand 0, single buffered']
    %8 = vsyncpa [#allocation4], 0
    %9 = vsyncpa [#allocation5], 0
    // Predicated region
    $region2: #{tpu_custom_call.1} parent=1 // pred_check
      _
    $region3: #{tpu_custom_call.1} parent=1 // pred_check_branch
      %11 = sbr.rel (0) target = $region5
    $region4: #{tpu_custom_call.1} parent=1 // pred_region
      %13 = vsyncadd [#allocation4], 0
      %s15 = sshll.u32 %s0, 4
      %s16 = int_to_ptr.hbm [resolvable:$true] %s15
      %s17 = sshll.u32 [#allocation3], 4
      %s18 = int_to_ptr.vmem [resolvable:$true] %s17
      %20 = dma.hbm_to_vmem [thread:$0]  %s16, 64, %s18, [#allocation4]
    $region5: #{tpu_custom_call.1} parent=1 // pred_fallthru
      _
    // Predicated region
    $region6: #{tpu_custom_call.1} parent=1 // pred_check
      _
    $region7: #{tpu_custom_call.1} parent=1 // pred_check_branch
      %22 = sbr.rel (0) target = $region9
    $region8: #{tpu_custom_call.1} parent=1 // pred_region
      _
    $region9: #{tpu_custom_call.1} parent=1 // pred_fallthru
      _
    // Predicated region
    $region10: #{tpu_custom_call.1} parent=1 // pred_check
      _
    $region11: #{tpu_custom_call.1} parent=1 // pred_check_branch
      %24 = sbr.rel (0) target = $region13
    $region12: #{tpu_custom_call.1} parent=1 // pred_region
      %26 = dma.done [#allocation4], 64
    $region13: #{tpu_custom_call.1} parent=1 // pred_fallthru
      _
    %v27 = vld [vmem:[#allocation3] sm:$0xf]
    %s28 = sld [smem:[#allocation2]]
    %v29 = vstv %s28
    %v30 = vadd.s32 %v27, %v29
    %v31 = vlaneseq
    %vm32 = vcmp.ge.s32.totalorder %v31, 0
    %vm33 = vcmp.lt.s32.totalorder %v31, 512
    %vm34 = vmand %vm32, %vm33
    %35 = vst.msk [vmem:[#allocation6] sm:$0xf] %vm34, %v30
    // Predicated region
    $region14: #{tpu_custom_call.1} parent=1 // pred_check
      _
    $region15: #{tpu_custom_call.1} parent=1 // pred_check_branch
      %37 = sbr.rel (0) target = $region17
    $region16: #{tpu_custom_call.1} parent=1 // pred_region
      %39 = vsyncadd [#allocation5], 0
      %s41 = sshll.u32 [#allocation6], 4
      %s42 = int_to_ptr.vmem [resolvable:$true] %s41
      %s43 = sshll.u32 %s2, 4
      %s44 = int_to_ptr.hbm [resolvable:$true] %s43
      %46 = dma.vmem_to_hbm [thread:$0]  %s42, 64, %s44, [#allocation5]
    $region17: #{tpu_custom_call.1} parent=1 // pred_fallthru
      _
    // Predicated region
    $region18: #{tpu_custom_call.1} parent=1 // pred_check
      _
    $region19: #{tpu_custom_call.1} parent=1 // pred_check_branch
      %48 = sbr.rel (0) target = $region21
    $region20: #{tpu_custom_call.1} parent=1 // pred_region
      %50 = dma.done [#allocation5], 64
    $region21: #{tpu_custom_call.1} parent=1 // pred_fallthru
      _
    %51 = vsyncpa [#allocation4], 1
    %52 = vsyncpa [#allocation5], 1

</llo_original>
